<compile_context>
chip_gen: v5e
topology: v5e:2x2
jax: 0.10.0
libtpu: 0.0.40
codegen_flags: <defaults>
</compile_context>

<pallas_src>
import jax
import jax.numpy as jnp
from jax.experimental import pallas as pl
from jax.experimental.pallas import tpu as pltpu

HIDDEN = 128  # fixed by the module spec


def _round_up(x, m):
    return ((x + m - 1) // m) * m


def dqn_kernel(x_ref, w1_ref, b1_ref, w2_ref, b2_ref, w3_ref, b3_ref, o_ref):
    # Layer 1: f32 matmul (K = input_dim is tiny; keeps raw inputs exact).
    h1 = jnp.dot(x_ref[...], w1_ref[...], preferred_element_type=jnp.float32)
    h1 = jnp.maximum(h1 + b1_ref[...], 0.0)
    # Layer 2: bf16 MXU operands, f32 accumulation; bias + ReLU in f32.
    h2 = jnp.dot(h1.astype(jnp.bfloat16), w2_ref[...],
                 preferred_element_type=jnp.float32)
    h2 = jnp.maximum(h2 + b2_ref[...], 0.0)
    # Layer 3 (no activation): bf16 MXU, f32 accumulation, f32 bias add.
    out = jnp.dot(h2.astype(jnp.bfloat16), w3_ref[...],
                  preferred_element_type=jnp.float32)
    o_ref[...] = (out + b3_ref[...]).astype(o_ref.dtype)


def prepare_params(params):
    """One-time parameter prep (hoisted out of the forward hot path).

    params: f32 (w1, b1, w2, b2, w3, b3) with W of shape (fan_in, fan_out).
    Returns kernel-ready operands: w1/b1 stay f32, w2/w3 become bf16,
    biases are (1, fan_out) f32 rows.
    """
    w1, b1, w2, b2, w3, b3 = params
    row = lambda b: jnp.asarray(b, jnp.float32).reshape(1, -1)
    return (
        jnp.asarray(w1, jnp.float32), row(b1),
        jnp.asarray(w2, jnp.bfloat16), row(b2),
        jnp.asarray(w3, jnp.bfloat16), row(b3),
    )


def dqn_forward(x, prepared, *, tile_m=None):
    """x: (batch, input_dim) f32. prepared: output of prepare_params()."""
    w1, b1, w2, b2, w3, b3 = prepared
    batch, input_dim = x.shape
    out_dim = w3.shape[1]

    # Batch tiling: target <=2 grid steps (both TCs on v7x; minimal per-step
    # overhead on 1-TC chips), multiple of 16 rows, capped at 512 rows so the
    # (tile_m, 128) f32 intermediates don't spill.
    if tile_m is None:
        tile_m = min(512, max(16, _round_up(pl.cdiv(batch, 2), 16)))
    tile_m = max(16, _round_up(min(tile_m, max(batch, 1)), 16))
    pad_m = pl.cdiv(batch, tile_m) * tile_m
    x_in = jnp.pad(x, ((0, pad_m - batch), (0, 0))) if pad_m != batch else x
    grid_m = pad_m // tile_m

    # Weights/biases: full-array block with constant index_map -> fetched once,
    # VMEM-resident across all batch tiles.
    const = lambda a: pl.BlockSpec(a.shape, lambda i: (0,) * a.ndim)

    flops = 2 * pad_m * (input_dim * HIDDEN + HIDDEN * HIDDEN + HIDDEN * out_dim)
    bytes_accessed = (
        pad_m * input_dim * 4                 # x (f32)
        + input_dim * HIDDEN * 4 + HIDDEN * 4  # w1, b1 (f32)
        + HIDDEN * HIDDEN * 2 + HIDDEN * 4     # w2 (bf16), b2 (f32)
        + HIDDEN * out_dim * 2 + out_dim * 4   # w3 (bf16), b3 (f32)
        + pad_m * out_dim * 4                  # output (f32, unpadded lanes)
    )

    out_padded = pl.pallas_call(
        dqn_kernel,
        out_shape=jax.ShapeDtypeStruct((pad_m, out_dim), jnp.float32),
        grid_spec=pl.GridSpec(
            grid=(grid_m,),
            in_specs=[
                pl.BlockSpec((tile_m, input_dim), lambda i: (i, 0)),  # x tiles
                const(w1), const(b1),
                const(w2), const(b2),
                const(w3), const(b3),
            ],
            # last dim == full array dim (out_dim) -> legal block; masked store
            # writes only the real columns (no 128-lane write amplification).
            out_specs=pl.BlockSpec((tile_m, out_dim), lambda i: (i, 0)),
        ),
        compiler_params=pltpu.CompilerParams(
            dimension_semantics=("parallel",)),  # v7x: shard tiles across 2 TCs
        cost_estimate=pl.CostEstimate(
            flops=flops, transcendentals=0, bytes_accessed=bytes_accessed),
    )(x_in, w1, b1, w2, b2, w3, b3)

    return out_padded[:batch]


def init_params(key, input_dim, hidden_dim, output_dim):
    # Matches torch.nn.Linear default init: U(-1/sqrt(fan_in), +1/sqrt(fan_in)).
    def linear_init(k, fan_in, fan_out):
        kw, kb = jax.random.split(k)
        bound = 1.0 / jnp.sqrt(fan_in)
        w = jax.random.uniform(kw, (fan_in, fan_out), jnp.float32, -bound, bound)
        b = jax.random.uniform(kb, (1, fan_out), jnp.float32, -bound, bound)
        return w, b

    k1, k2, k3 = jax.random.split(key, 3)
    w1, b1 = linear_init(k1, input_dim, hidden_dim)
    w2, b2 = linear_init(k2, hidden_dim, hidden_dim)
    w3, b3 = linear_init(k3, hidden_dim, output_dim)
    return (w1, b1, w2, b2, w3, b3)


def dqn_reference(x, params):
    # Pure-f32 reference matching the PyTorch module semantics.
    w1, b1, w2, b2, w3, b3 = params
    h = jnp.maximum(x @ w1 + b1, 0.0)
    h = jnp.maximum(h @ w2 + b2, 0.0)
    return h @ w3 + b3


if __name__ == "__main__":
    key = jax.random.PRNGKey(0)
    k_x, k_p = jax.random.split(key)

    # Replay-minibatch-sized batch so the batch grid / both-TC split is exercised.
    batch, input_dim, hidden_dim, output_dim = 256, 16, 128, 4
    x = jax.random.normal(k_x, (batch, input_dim), jnp.float32)
    params = init_params(k_p, input_dim, hidden_dim, output_dim)

    prepared = prepare_params(params)  # one-time param prep, reused every call
    out = dqn_forward(x, prepared)
    out = jax.block_until_ready(out)

    ref = dqn_reference(x, params)
    assert out.shape == (batch, output_dim)
    # Layers 2/3 use bf16 operands (f32 accumulation); layer 1 is pure f32.
    err = float(jnp.max(jnp.abs(out - ref)))
    assert jnp.allclose(out, ref, atol=5e-2, rtol=5e-2), f"max abs err {err}"

    print("KERNEL_OK")
</pallas_src>

<mosaic_0001>
module attributes {stable_mosaic.version = 11 : i64} {
  func.func @dqn_kernel(%arg0: i32, %arg1: memref<128x16xf32, #tpu.memory_space<vmem>>, %arg2: memref<16x128xf32, #tpu.memory_space<vmem>>, %arg3: memref<1x128xf32, #tpu.memory_space<vmem>>, %arg4: memref<128x128xbf16, #tpu.memory_space<vmem>>, %arg5: memref<1x128xf32, #tpu.memory_space<vmem>>, %arg6: memref<128x4xbf16, #tpu.memory_space<vmem>>, %arg7: memref<1x4xf32, #tpu.memory_space<vmem>>, %arg8: memref<128x4xf32, #tpu.memory_space<vmem>>) attributes {dimension_semantics = [#tpu.dimension_semantics<parallel>], iteration_bounds = array<i64: 2>, scalar_prefetch = 0 : i64, scratch_operands = 0 : i64, tpu.core_type = #tpu.core_type<tc>, window_params = [{transform_indices = @transform_0, window_bounds = array<i64: 128, 16>}, {pipeline_mode = #tpu.pipeline_mode<synchronous>, transform_indices = @transform_1, window_bounds = array<i64: 16, 128>}, {pipeline_mode = #tpu.pipeline_mode<synchronous>, transform_indices = @transform_2, window_bounds = array<i64: 1, 128>}, {pipeline_mode = #tpu.pipeline_mode<synchronous>, transform_indices = @transform_3, window_bounds = array<i64: 128, 128>}, {pipeline_mode = #tpu.pipeline_mode<synchronous>, transform_indices = @transform_4, window_bounds = array<i64: 1, 128>}, {pipeline_mode = #tpu.pipeline_mode<synchronous>, transform_indices = @transform_5, window_bounds = array<i64: 128, 4>}, {pipeline_mode = #tpu.pipeline_mode<synchronous>, transform_indices = @transform_6, window_bounds = array<i64: 1, 4>}, {transform_indices = @transform_7, window_bounds = array<i64: 128, 4>}]} {
    %c0 = arith.constant 0 : index
    %c0_0 = arith.constant 0 : index
    %0 = vector.load %arg1[%c0, %c0_0] : memref<128x16xf32, #tpu.memory_space<vmem>>, vector<128x16xf32>
    %c0_1 = arith.constant 0 : index
    %c0_2 = arith.constant 0 : index
    %1 = vector.load %arg2[%c0_1, %c0_2] : memref<16x128xf32, #tpu.memory_space<vmem>>, vector<16x128xf32>
    %cst = arith.constant dense<0.000000e+00> : vector<128x128xf32>
    %2 = tpu.matmul %0, %1, %cst {dimension_numbers = #tpu.dot_dimension_numbers<[1], [0], [0], [1], [0, 0, 1, 1], [], []>} : vector<128x16xf32>, vector<16x128xf32>, vector<128x128xf32> -> vector<128x128xf32>
    %c0_3 = arith.constant 0 : index
    %c0_4 = arith.constant 0 : index
    %3 = vector.load %arg3[%c0_3, %c0_4] : memref<1x128xf32, #tpu.memory_space<vmem>>, vector<1x128xf32>
    %4 = vector.broadcast %3 : vector<1x128xf32> to vector<128x128xf32>
    %5 = arith.addf %2, %4 : vector<128x128xf32>
    %cst_5 = arith.constant 0.000000e+00 : f32
    %6 = vector.broadcast %cst_5 : f32 to vector<128x128xf32>
    %7 = arith.maximumf %5, %6 : vector<128x128xf32>
    %8 = arith.truncf %7 : vector<128x128xf32> to vector<128x128xbf16>
    %c0_6 = arith.constant 0 : index
    %c0_7 = arith.constant 0 : index
    %9 = vector.load %arg4[%c0_6, %c0_7] : memref<128x128xbf16, #tpu.memory_space<vmem>>, vector<128x128xbf16>
    %cst_8 = arith.constant dense<0.000000e+00> : vector<128x128xf32>
    %10 = tpu.matmul %8, %9, %cst_8 {dimension_numbers = #tpu.dot_dimension_numbers<[1], [0], [0], [1], [0, 0, 1, 1], [], []>} : vector<128x128xbf16>, vector<128x128xbf16>, vector<128x128xf32> -> vector<128x128xf32>
    %c0_9 = arith.constant 0 : index
    %c0_10 = arith.constant 0 : index
    %11 = vector.load %arg5[%c0_9, %c0_10] : memref<1x128xf32, #tpu.memory_space<vmem>>, vector<1x128xf32>
    %12 = vector.broadcast %11 : vector<1x128xf32> to vector<128x128xf32>
    %13 = arith.addf %10, %12 : vector<128x128xf32>
    %cst_11 = arith.constant 0.000000e+00 : f32
    %14 = vector.broadcast %cst_11 : f32 to vector<128x128xf32>
    %15 = arith.maximumf %13, %14 : vector<128x128xf32>
    %16 = arith.truncf %15 : vector<128x128xf32> to vector<128x128xbf16>
    %c0_12 = arith.constant 0 : index
    %c0_13 = arith.constant 0 : index
    %17 = vector.load %arg6[%c0_12, %c0_13] : memref<128x4xbf16, #tpu.memory_space<vmem>>, vector<128x4xbf16>
    %cst_14 = arith.constant dense<0.000000e+00> : vector<128x4xf32>
    %18 = tpu.matmul %16, %17, %cst_14 {dimension_numbers = #tpu.dot_dimension_numbers<[1], [0], [0], [1], [0, 0, 1, 1], [], []>} : vector<128x128xbf16>, vector<128x4xbf16>, vector<128x4xf32> -> vector<128x4xf32>
    %c0_15 = arith.constant 0 : index
    %c0_16 = arith.constant 0 : index
    %19 = vector.load %arg7[%c0_15, %c0_16] : memref<1x4xf32, #tpu.memory_space<vmem>>, vector<1x4xf32>
    %20 = vector.broadcast %19 : vector<1x4xf32> to vector<128x4xf32>
    %21 = arith.addf %18, %20 : vector<128x4xf32>
    %c0_17 = arith.constant 0 : index
    %c0_18 = arith.constant 0 : index
    %22 = vector.load %arg8[%c0_17, %c0_18] : memref<128x4xf32, #tpu.memory_space<vmem>>, vector<128x4xf32>
    tpu.vector_store %arg8[%c0_17, %c0_18], %21 {strides = array<i32>} : memref<128x4xf32, #tpu.memory_space<vmem>>, vector<128x4xf32>,
    return
  }
  func.func @transform_0(%arg0: i32) -> (i32, i32) {
    %c0_i32 = arith.constant 0 : i32
    %c0_i32_0 = arith.constant 0 : i32
    return %arg0, %c0_i32 : i32, i32
  }
  func.func @transform_1(%arg0: i32) -> (i32, i32) {
    %c0_i32 = arith.constant 0 : i32
    %c0_i32_0 = arith.constant 0 : i32
    %c0_i32_1 = arith.constant 0 : i32
    return %c0_i32, %c0_i32_0 : i32, i32
  }
  func.func @transform_2(%arg0: i32) -> (i32, i32) {
    %c0_i32 = arith.constant 0 : i32
    %c0_i32_0 = arith.constant 0 : i32
    %c0_i32_1 = arith.constant 0 : i32
    return %c0_i32, %c0_i32_0 : i32, i32
  }
  func.func @transform_3(%arg0: i32) -> (i32, i32) {
    %c0_i32 = arith.constant 0 : i32
    %c0_i32_0 = arith.constant 0 : i32
    %c0_i32_1 = arith.constant 0 : i32
    return %c0_i32, %c0_i32_0 : i32, i32
  }
  func.func @transform_4(%arg0: i32) -> (i32, i32) {
    %c0_i32 = arith.constant 0 : i32
    %c0_i32_0 = arith.constant 0 : i32
    %c0_i32_1 = arith.constant 0 : i32
    return %c0_i32, %c0_i32_0 : i32, i32
  }
  func.func @transform_5(%arg0: i32) -> (i32, i32) {
    %c0_i32 = arith.constant 0 : i32
    %c0_i32_0 = arith.constant 0 : i32
    %c0_i32_1 = arith.constant 0 : i32
    return %c0_i32, %c0_i32_0 : i32, i32
  }
  func.func @transform_6(%arg0: i32) -> (i32, i32) {
    %c0_i32 = arith.constant 0 : i32
    %c0_i32_0 = arith.constant 0 : i32
    %c0_i32_1 = arith.constant 0 : i32
    return %c0_i32, %c0_i32_0 : i32, i32
  }
  func.func @transform_7(%arg0: i32) -> (i32, i32) {
    %c0_i32 = arith.constant 0 : i32
    %c0_i32_0 = arith.constant 0 : i32
    return %arg0, %c0_i32 : i32, i32
  }
}

</mosaic_0001>

<llo_original>
// kernel: tpu_custom_call.1
$region0: #{tpu_custom_call.1}
  #allocation0 [shape = 'u32[]', space=smem, size = 0x4, offset = 0x4, fixed_abs, tag = 'smem constant byte address 0x4 - core index']
  #allocation1 [shape = 'u32[72,128]{1,0:T(1,128)}', space=vmem, size = 0x9000, scoped, tag = 'internal scratch']
  %s0 = inlined_call_operand.vmem [shape: f32[256,16], index: 0, kind: input, shape index: {}]
  %s1 = inlined_call_operand.vmem [shape: f32[16,128], index: 1, kind: input, shape index: {}]
  %s2 = inlined_call_operand.vmem [shape: f32[1,128], index: 2, kind: input, shape index: {}]
  %s3 = inlined_call_operand.vmem [shape: bf16[128,128], index: 3, kind: input, shape index: {}]
  %s4 = inlined_call_operand.vmem [shape: f32[1,128], index: 4, kind: input, shape index: {}]
  %s5 = inlined_call_operand.vmem [shape: bf16[128,4], index: 5, kind: input, shape index: {}]
  %s6 = inlined_call_operand.vmem [shape: f32[1,4], index: 6, kind: input, shape index: {}]
  %s7 = inlined_call_operand.vmem [shape: f32[256,4], index: 7, kind: output, shape index: {}]
  %s8 = sld [smem:[#allocation0]]
  $region61: #{tpu_custom_call.1} parent=0
    _
  %s10 = ssub.s32 1, %s8
  %s11 = scalar_select 0, %s10, %s8
  loop: start=0, step=1, limit=4
  $region2: #{tpu_custom_call.1} parent=0 // loop_pre_header
    _
  $region3: #{tpu_custom_call.1} parent=0 // loop_header
    %s13 = sphi 0, %s17
    %p14 = scmp.ge.s32.totalorder %s13, 4
    %s23 = sphi 0, %s25
    %s26 = sphi 0, %s23
    %s27 = sphi 0, %s26
    %s43 = sphi 0, %s27
    %s47 = sphi 0, %s47
    %s49 = sphi 0, %s47
    %s50 = sphi 0, %s49
    %s64 = sphi 0, %s50
    %s68 = sphi 0, %s68
    %s70 = sphi 0, %s68
    %s71 = sphi 0, %s70
    %s85 = sphi 0, %s71
    %s89 = sphi 0, %s89
    %s91 = sphi 0, %s89
    %s92 = sphi 0, %s91
    %s106 = sphi 0, %s92
    %s110 = sphi 0, %s110
    %s112 = sphi 0, %s110
    %s113 = sphi 0, %s112
    %s127 = sphi 0, %s113
    %s131 = sphi 0, %s131
    %s133 = sphi 0, %s131
    %s134 = sphi 0, %s133
    %s148 = sphi 0, %s134
    %s152 = sphi 0, %s152
    %s154 = sphi 0, %s152
    %s155 = sphi 0, %s154
    %s169 = sphi 0, %s155
    %s175 = sphi 0, %s177
    %s178 = sphi 0, %s175
    %s179 = sphi 0, %s178
    %s195 = sphi 0, %s179
  $region4: #{tpu_custom_call.1} parent=0 // loop_header_branch
    %16 = sbr.rel (%p14) target = $region8
  $region5: #{tpu_custom_call.1} parent=0 // loop_body
    %s18 = ssub.s32 %s13, 1
    %s19 = ssub.s32 %s13, 2
    %s20 = sadd.s32 %s13, 1
    %s21 = ssub.s32 %s13, %s20
    %p22 = scmp.eq.s32.totalorder %s21, 0
    %s24 = sadd.s32 %s23, 1
    %s25 = scalar_select %p22, %s23, %s24
    %p28 = pneg %p22
    %p29 = scmp.eq.s32.totalorder %s13, 1
    %p30 = por %p28, %p29
    %p31 = scmp.ne.s32.totalorder %s23, %s26
    %p32 = scmp.eq.s32.totalorder %s13, 0
    %p33 = por %p31, %p32
    %p34 = scmp.ne.s32.totalorder %s23, %s26
    %p35 = scmp.eq.s32.totalorder %s18, 1
    %p36 = por %p34, %p35
    %p37 = scmp.ne.s32.totalorder %s26, %s27
    %p38 = scmp.eq.s32.totalorder %s18, 0
    %p39 = por %p37, %p38
    %p40 = scmp.ne.s32.totalorder %s26, %s27
    %p41 = scmp.eq.s32.totalorder %s19, 1
    %p42 = por %p40, %p41
    %p44 = scmp.ne.s32.totalorder %s27, %s43
    %p45 = scmp.eq.s32.totalorder %s19, 0
    %p46 = por %p44, %p45
    %s48 = sadd.s32 %s47, 1
    %p51 = scmp.eq.s32.totalorder %s13, 1
    %p52 = scmp.ne.s32.totalorder %s47, %s49
    %p53 = scmp.eq.s32.totalorder %s13, 0
    %p54 = por %p52, %p53
    %p55 = scmp.ne.s32.totalorder %s47, %s49
    %p56 = scmp.eq.s32.totalorder %s18, 1
    %p57 = por %p55, %p56
    %p58 = scmp.ne.s32.totalorder %s49, %s50
    %p59 = scmp.eq.s32.totalorder %s18, 0
    %p60 = por %p58, %p59
    %p61 = scmp.ne.s32.totalorder %s49, %s50
    %p62 = scmp.eq.s32.totalorder %s19, 1
    %p63 = por %p61, %p62
    %p65 = scmp.ne.s32.totalorder %s50, %s64
    %p66 = scmp.eq.s32.totalorder %s19, 0
    %p67 = por %p65, %p66
    %s69 = sadd.s32 %s68, 1
    %p72 = scmp.eq.s32.totalorder %s13, 1
    %p73 = scmp.ne.s32.totalorder %s68, %s70
    %p74 = scmp.eq.s32.totalorder %s13, 0
    %p75 = por %p73, %p74
    %p76 = scmp.ne.s32.totalorder %s68, %s70
    %p77 = scmp.eq.s32.totalorder %s18, 1
    %p78 = por %p76, %p77
    %p79 = scmp.ne.s32.totalorder %s70, %s71
    %p80 = scmp.eq.s32.totalorder %s18, 0
    %p81 = por %p79, %p80
    %p82 = scmp.ne.s32.totalorder %s70, %s71
    %p83 = scmp.eq.s32.totalorder %s19, 1
    %p84 = por %p82, %p83
    %p86 = scmp.ne.s32.totalorder %s71, %s85
    %p87 = scmp.eq.s32.totalorder %s19, 0
    %p88 = por %p86, %p87
    %s90 = sadd.s32 %s89, 1
    %p93 = scmp.eq.s32.totalorder %s13, 1
    %p94 = scmp.ne.s32.totalorder %s89, %s91
    %p95 = scmp.eq.s32.totalorder %s13, 0
    %p96 = por %p94, %p95
    %p97 = scmp.ne.s32.totalorder %s89, %s91
    %p98 = scmp.eq.s32.totalorder %s18, 1
    %p99 = por %p97, %p98
    %p100 = scmp.ne.s32.totalorder %s91, %s92
    %p101 = scmp.eq.s32.totalorder %s18, 0
    %p102 = por %p100, %p101
    %p103 = scmp.ne.s32.totalorder %s91, %s92
    %p104 = scmp.eq.s32.totalorder %s19, 1
    %p105 = por %p103, %p104
    %p107 = scmp.ne.s32.totalorder %s92, %s106
    %p108 = scmp.eq.s32.totalorder %s19, 0
    %p109 = por %p107, %p108
    %s111 = sadd.s32 %s110, 1
    %p114 = scmp.eq.s32.totalorder %s13, 1
    %p115 = scmp.ne.s32.totalorder %s110, %s112
    %p116 = scmp.eq.s32.totalorder %s13, 0
    %p117 = por %p115, %p116
    %p118 = scmp.ne.s32.totalorder %s110, %s112
    %p119 = scmp.eq.s32.totalorder %s18, 1
    %p120 = por %p118, %p119
    %p121 = scmp.ne.s32.totalorder %s112, %s113
    %p122 = scmp.eq.s32.totalorder %s18, 0
    %p123 = por %p121, %p122
    %p124 = scmp.ne.s32.totalorder %s112, %s113
    %p125 = scmp.eq.s32.totalorder %s19, 1
    %p126 = por %p124, %p125
    %p128 = scmp.ne.s32.totalorder %s113, %s127
    %p129 = scmp.eq.s32.totalorder %s19, 0
    %p130 = por %p128, %p129
    %s132 = sadd.s32 %s131, 1
    %p135 = scmp.eq.s32.totalorder %s13, 1
    %p136 = scmp.ne.s32.totalorder %s131, %s133
    %p137 = scmp.eq.s32.totalorder %s13, 0
    %p138 = por %p136, %p137
    %p139 = scmp.ne.s32.totalorder %s131, %s133
    %p140 = scmp.eq.s32.totalorder %s18, 1
    %p141 = por %p139, %p140
    %p142 = scmp.ne.s32.totalorder %s133, %s134
    %p143 = scmp.eq.s32.totalorder %s18, 0
    %p144 = por %p142, %p143
    %p145 = scmp.ne.s32.totalorder %s133, %s134
    %p146 = scmp.eq.s32.totalorder %s19, 1
    %p147 = por %p145, %p146
    %p149 = scmp.ne.s32.totalorder %s134, %s148
    %p150 = scmp.eq.s32.totalorder %s19, 0
    %p151 = por %p149, %p150
    %s153 = sadd.s32 %s152, 1
    %p156 = scmp.eq.s32.totalorder %s13, 1
    %p157 = scmp.ne.s32.totalorder %s152, %s154
    %p158 = scmp.eq.s32.totalorder %s13, 0
    %p159 = por %p157, %p158
    %p160 = scmp.ne.s32.totalorder %s152, %s154
    %p161 = scmp.eq.s32.totalorder %s18, 1
    %p162 = por %p160, %p161
    %p163 = scmp.ne.s32.totalorder %s154, %s155
    %p164 = scmp.eq.s32.totalorder %s18, 0
    %p165 = por %p163, %p164
    %p166 = scmp.ne.s32.totalorder %s154, %s155
    %p167 = scmp.eq.s32.totalorder %s19, 1
    %p168 = por %p166, %p167
    %p170 = scmp.ne.s32.totalorder %s155, %s169
    %p171 = scmp.eq.s32.totalorder %s19, 0
    %p172 = por %p170, %p171
    %s173 = ssub.s32 %s13, %s20
    %p174 = scmp.eq.s32.totalorder %s173, 0
    %s176 = sadd.s32 %s175, 1
    %s177 = scalar_select %p174, %s175, %s176
    %p180 = pneg %p174
    %p181 = scmp.eq.s32.totalorder %s13, 1
    %p182 = por %p180, %p181
    %p183 = scmp.ne.s32.totalorder %s175, %s178
    %p184 = scmp.eq.s32.totalorder %s13, 0
    %p185 = por %p183, %p184
    %p186 = scmp.ne.s32.totalorder %s175, %s178
    %p187 = scmp.eq.s32.totalorder %s18, 1
    %p188 = por %p186, %p187
    %p189 = scmp.ne.s32.totalorder %s178, %s179
    %p190 = scmp.eq.s32.totalorder %s18, 0
    %p191 = por %p189, %p190
    %p192 = scmp.ne.s32.totalorder %s178, %s179
    %p193 = scmp.eq.s32.totalorder %s19, 1
    %p194 = por %p192, %p193
    %p196 = scmp.ne.s32.totalorder %s179, %s195
    %p197 = scmp.eq.s32.totalorder %s19, 0
    %p198 = por %p196, %p197
    %p199 = scmp.le.s32.totalorder 1, %s13
    %p200 = scmp.lt.s32.totalorder %s13, 3
    %p201 = pnand %p199, %p200
    %p202 = pneg %p201
    // Predicated region
    $region9: #{tpu_custom_call.1} parent=5 // pred_check
      _
    $region10: #{tpu_custom_call.1} parent=5 // pred_check_branch
      %204 = sbr.rel (%p201) target = $region12
    $region11: #{tpu_custom_call.1} parent=5 // pred_region
      %s205 = ssub.s32 %s13, 1
      // Predicated region
      $region13: #{tpu_custom_call.1} parent=11 // pred_check
        %p206 = pneg %p60
      $region14: #{tpu_custom_call.1} parent=11 // pred_check_branch
        %208 = sbr.rel (%p206) target = $region16
      $region15: #{tpu_custom_call.1} parent=11 // pred_region
        _
      $region16: #{tpu_custom_call.1} parent=11 // pred_fallthru
        _
      // Predicated region
      $region17: #{tpu_custom_call.1} parent=11 // pred_check
        %p209 = pneg %p81
      $region18: #{tpu_custom_call.1} parent=11 // pred_check_branch
        %211 = sbr.rel (%p209) target = $region20
      $region19: #{tpu_custom_call.1} parent=11 // pred_region
        _
      $region20: #{tpu_custom_call.1} parent=11 // pred_fallthru
        _
      // Predicated region
      $region21: #{tpu_custom_call.1} parent=11 // pred_check
        %p212 = pneg %p102
      $region22: #{tpu_custom_call.1} parent=11 // pred_check_branch
        %214 = sbr.rel (%p212) target = $region24
      $region23: #{tpu_custom_call.1} parent=11 // pred_region
        _
      $region24: #{tpu_custom_call.1} parent=11 // pred_fallthru
        _
      // Predicated region
      $region25: #{tpu_custom_call.1} parent=11 // pred_check
        %p215 = pneg %p123
      $region26: #{tpu_custom_call.1} parent=11 // pred_check_branch
        %217 = sbr.rel (%p215) target = $region28
      $region27: #{tpu_custom_call.1} parent=11 // pred_region
        _
      $region28: #{tpu_custom_call.1} parent=11 // pred_fallthru
        _
      // Predicated region
      $region29: #{tpu_custom_call.1} parent=11 // pred_check
        %p218 = pneg %p144
      $region30: #{tpu_custom_call.1} parent=11 // pred_check_branch
        %220 = sbr.rel (%p218) target = $region32
      $region31: #{tpu_custom_call.1} parent=11 // pred_region
        _
      $region32: #{tpu_custom_call.1} parent=11 // pred_fallthru
        _
      // Predicated region
      $region33: #{tpu_custom_call.1} parent=11 // pred_check
        %p221 = pneg %p165
      $region34: #{tpu_custom_call.1} parent=11 // pred_check_branch
        %223 = sbr.rel (%p221) target = $region36
      $region35: #{tpu_custom_call.1} parent=11 // pred_region
        _
      $region36: #{tpu_custom_call.1} parent=11 // pred_fallthru
        _
    $region12: #{tpu_custom_call.1} parent=5 // pred_fallthru
      _
    %p224 = scmp.lt.s32.totalorder %s13, 2
    // Predicated region
    $region37: #{tpu_custom_call.1} parent=5 // pred_check
      %p225 = pneg %p224
    $region38: #{tpu_custom_call.1} parent=5 // pred_check_branch
      %227 = sbr.rel (%p225) target = $region40
    $region39: #{tpu_custom_call.1} parent=5 // pred_region
      // Predicated region
      $region41: #{tpu_custom_call.1} parent=39 // pred_check
        %p228 = pneg %p33
      $region42: #{tpu_custom_call.1} parent=39 // pred_check_branch
        %230 = sbr.rel (%p228) target = $region44
      $region43: #{tpu_custom_call.1} parent=39 // pred_region
        %s231 = smul.u32 16, %s13
        %p232 = scmp.lt.s32.totalorder %s231, 31
        %s233 = scalar_select %p232, %s231, 31
        %s234 = smul.addr %s233, 8
        %s235 = scalar_lea.vmem %s0, %s234
        %s236 = smul.u32 16, %s13
      $region44: #{tpu_custom_call.1} parent=39 // pred_fallthru
        _
    $region40: #{tpu_custom_call.1} parent=5 // pred_fallthru
      _
    %p237 = scmp.le.s32.totalorder 1, %s13
    %p238 = scmp.lt.s32.totalorder %s13, 3
    %p239 = pnand %p237, %p238
    %p240 = pneg %p239
    // Predicated region
    $region45: #{tpu_custom_call.1} parent=5 // pred_check
      _
    $region46: #{tpu_custom_call.1} parent=5 // pred_check_branch
      %242 = sbr.rel (%p239) target = $region48
    $region47: #{tpu_custom_call.1} parent=5 // pred_region
      %s243 = ssub.s32 %s13, 1
      %s244 = smul.u32 16, %s18
      %p245 = scmp.lt.s32.totalorder %s244, 31
      %s246 = scalar_select %p245, %s244, 31
      %s247 = smul.addr %s246, 8
      %s248 = scalar_lea.vmem %s0, %s247
      %p249 = pneg %p39
      %p250 = pneg %p36
      %p251 = pneg %p60
      %p252 = pneg %p57
      %p253 = pneg %p81
      %p254 = pneg %p78
      %p255 = pneg %p102
      %p256 = pneg %p99
      %p257 = pneg %p123
      %p258 = pneg %p120
      %p259 = pneg %p144
      %p260 = pneg %p141
      %p261 = pneg %p165
      %p262 = pneg %p162
      %p263 = pneg %p191
      %p264 = pneg %p188
      %s265 = smul.u32 16, %s18
      %p266 = scmp.lt.s32.totalorder %s265, 31
      %s267 = scalar_select %p266, %s265, 31
      %s268 = smul.addr %s267, 8
      %s269 = scalar_lea.vmem %s7, %s268
      %s270 = smul.u32 16, %s18
      %p271 = scmp.lt.s32.totalorder %s270, 31
      %s272 = scalar_select %p271, %s270, 31
      %s273 = smul.addr %s272, 8
      %s274 = scalar_lea.vmem %s0, %s273
      %s275 = smul.u32 16, %s18
      %s276 = smul.u32 16, %s18
      %p277 = scmp.lt.s32.totalorder %s276, 31
      %s278 = scalar_select %p277, %s276, 31
      %s279 = smul.addr %s278, 8
      %s280 = scalar_lea.vmem %s7, %s279
      %s281 = smul.u32 16, %s18
      %v282 = vld [vmem:[%s274] sm:$0xff]
      %v283 = vld [vmem:[%s274 + $0x8] sm:$0xff]
      %v284 = vld [vmem:[%s274 + $0x10] sm:$0xff]
      %v285 = vld [vmem:[%s274 + $0x18] sm:$0xff]
      %v286 = vld [vmem:[%s274 + $0x20] sm:$0xff]
      %v287 = vld [vmem:[%s274 + $0x28] sm:$0xff]
      %v288 = vld [vmem:[%s274 + $0x30] sm:$0xff]
      %v289 = vld [vmem:[%s274 + $0x38] sm:$0xff]
      %v290 = vld [vmem:[%s274 + $0x40] sm:$0xff]
      %v291 = vld [vmem:[%s274 + $0x48] sm:$0xff]
      %v292 = vld [vmem:[%s274 + $0x50] sm:$0xff]
      %v293 = vld [vmem:[%s274 + $0x58] sm:$0xff]
      %v294 = vld [vmem:[%s274 + $0x60] sm:$0xff]
      %v295 = vld [vmem:[%s274 + $0x68] sm:$0xff]
      %v296 = vld [vmem:[%s274 + $0x70] sm:$0xff]
      %v297 = vld [vmem:[%s274 + $0x78] sm:$0xff]
      %v298 = vld [vmem:[%s1] sm:$0xff]
      %v299 = vld [vmem:[%s1 + $0x8] sm:$0xff]
      %v300 = vld [vmem:[%s2] sm:$0x1]
      %v302 = vperm.slane %v300, 0
      %vm304 = vcmask 130048
      %v306 = vsel %vm304, %v282, 0
      %v309 = vsel %vm304, %v283, 0
      %v312 = vsel %vm304, %v284, 0
      %v315 = vsel %vm304, %v285, 0
      %v318 = vsel %vm304, %v286, 0
      %v321 = vsel %vm304, %v287, 0
      %v324 = vsel %vm304, %v288, 0
      %v327 = vsel %vm304, %v289, 0
      %v330 = vsel %vm304, %v290, 0
      %v333 = vsel %vm304, %v291, 0
      %v336 = vsel %vm304, %v292, 0
      %v339 = vsel %vm304, %v293, 0
      %v342 = vsel %vm304, %v294, 0
      %v345 = vsel %vm304, %v295, 0
      %v348 = vsel %vm304, %v296, 0
      %v351 = vsel %vm304, %v297, 0
      %353 = vmatpush.msra.mxu0 0.0
      %354 = vmatpush.msra.mxu0 0.0
      %355 = vmatpush.msra.mxu0 0.0
      %356 = vmatpush.msra.mxu0 0.0
      %357 = vmatpush.msra.mxu0 0.0
      %358 = vmatpush.msra.mxu0 0.0
      %359 = vmatpush.msra.mxu0 0.0
      %360 = vmatpush.msra.mxu0 0.0
      %361 = vmatpush.msra.mxu0 0.0
      %362 = vmatpush.msra.mxu0 0.0
      %363 = vmatpush.msra.mxu0 0.0
      %364 = vmatpush.msra.mxu0 0.0
      %365 = vmatpush.msra.mxu0 0.0
      %366 = vmatpush.msra.mxu0 0.0
      %367 = vmatpush.msra.mxu0 %v299
      %368 = vmatpush.msra.mxu0 %v298
      %369 = vmatmul.f32.gmra.mxu0 %v306
      %v370 = vpop.f32.mrf.mxu0
      %v371 = vadd.f32 %v302, %v370
      %372 = vmatmul.f32.gmra.mxu0 %v309
      %v373 = vpop.f32.mrf.mxu0
      %v374 = vadd.f32 %v302, %v373
      %375 = vmatmul.f32.gmra.mxu0 %v312
      %v376 = vpop.f32.mrf.mxu0
      %v377 = vadd.f32 %v302, %v376
      %378 = vmatmul.f32.gmra.mxu0 %v315
      %v379 = vpop.f32.mrf.mxu0
      %v380 = vadd.f32 %v302, %v379
      %381 = vmatmul.f32.gmra.mxu0 %v318
      %v382 = vpop.f32.mrf.mxu0
      %v383 = vadd.f32 %v302, %v382
      %384 = vmatmul.f32.gmra.mxu0 %v321
      %v385 = vpop.f32.mrf.mxu0
      %v386 = vadd.f32 %v302, %v385
      %387 = vmatmul.f32.gmra.mxu0 %v324
      %v388 = vpop.f32.mrf.mxu0
      %v389 = vadd.f32 %v302, %v388
      %390 = vmatmul.f32.gmra.mxu0 %v327
      %v391 = vpop.f32.mrf.mxu0
      %v392 = vadd.f32 %v302, %v391
      %393 = vmatmul.f32.gmra.mxu0 %v330
      %v394 = vpop.f32.mrf.mxu0
      %v395 = vadd.f32 %v302, %v394
      %396 = vmatmul.f32.gmra.mxu0 %v333
      %v397 = vpop.f32.mrf.mxu0
      %v398 = vadd.f32 %v302, %v397
      %399 = vmatmul.f32.gmra.mxu0 %v336
      %v400 = vpop.f32.mrf.mxu0
      %v401 = vadd.f32 %v302, %v400
      %402 = vmatmul.f32.gmra.mxu0 %v339
      %v403 = vpop.f32.mrf.mxu0
      %v404 = vadd.f32 %v302, %v403
      %405 = vmatmul.f32.gmra.mxu0 %v342
      %v406 = vpop.f32.mrf.mxu0
      %v407 = vadd.f32 %v302, %v406
      %408 = vmatmul.f32.gmra.mxu0 %v345
      %v409 = vpop.f32.mrf.mxu0
      %v410 = vadd.f32 %v302, %v409
      %411 = vmatmul.f32.gmra.mxu0 %v348
      %v412 = vpop.f32.mrf.mxu0
      %v413 = vadd.f32 %v302, %v412
      %414 = vmatmul.f32.gmra.mxu0 %v351
      %v415 = vpop.f32.mrf.mxu0
      %v416 = vadd.f32 %v302, %v415
      %417 = vdwg.mxu0
      %v418 = vmax.f32 %v371, 0.0
      %v419 = vmax.f32 %v374, 0.0
      %v420 = vmax.f32 %v377, 0.0
      %v421 = vmax.f32 %v380, 0.0
      %v422 = vmax.f32 %v383, 0.0
      %v423 = vmax.f32 %v386, 0.0
      %v424 = vmax.f32 %v389, 0.0
      %v425 = vmax.f32 %v392, 0.0
      %v426 = vmax.f32 %v395, 0.0
      %v427 = vmax.f32 %v398, 0.0
      %v428 = vmax.f32 %v401, 0.0
      %v429 = vmax.f32 %v404, 0.0
      %v430 = vmax.f32 %v407, 0.0
      %v431 = vmax.f32 %v410, 0.0
      %v432 = vmax.f32 %v413, 0.0
      %v433 = vmax.f32 %v416, 0.0
      %v434 = vpack.c.bf16 %v419, %v418
      %v435 = vpack.c.bf16 %v421, %v420
      %v436 = vpack.c.bf16 %v423, %v422
      %v437 = vpack.c.bf16 %v425, %v424
      %v438 = vpack.c.bf16 %v427, %v426
      %v439 = vpack.c.bf16 %v429, %v428
      %v440 = vpack.c.bf16 %v431, %v430
      %v441 = vpack.c.bf16 %v433, %v432
      %v442 = vld [vmem:[%s3] sm:$0xf]
      %v443 = vld [vmem:[%s3 + $0x4] sm:$0xf]
      %v444 = vld [vmem:[%s3 + $0x8] sm:$0xf]
      %v445 = vld [vmem:[%s3 + $0xc] sm:$0xf]
      %v446 = vld [vmem:[%s3 + $0x10] sm:$0xf]
      %v447 = vld [vmem:[%s3 + $0x14] sm:$0xf]
      %v448 = vld [vmem:[%s3 + $0x18] sm:$0xf]
      %v449 = vld [vmem:[%s3 + $0x1c] sm:$0xf]
      %v450 = vld [vmem:[%s3 + $0x20] sm:$0xf]
      %v451 = vld [vmem:[%s3 + $0x24] sm:$0xf]
      %v452 = vld [vmem:[%s3 + $0x28] sm:$0xf]
      %v453 = vld [vmem:[%s3 + $0x2c] sm:$0xf]
      %v454 = vld [vmem:[%s3 + $0x30] sm:$0xf]
      %v455 = vld [vmem:[%s3 + $0x34] sm:$0xf]
      %v456 = vld [vmem:[%s3 + $0x38] sm:$0xf]
      %v457 = vld [vmem:[%s3 + $0x3c] sm:$0xf]
      %v458 = vld [vmem:[%s4] sm:$0x1]
      %v460 = vperm.slane %v458, 0
      %v478 = vunpack.c.l.b16 %v442
      %v479 = vunpack.c.l.b16 %v443
      %v480 = vunpack.c.l.b16 %v444
      %v481 = vunpack.c.l.b16 %v445
      %v482 = vunpack.c.l.b16 %v446
      %v483 = vunpack.c.l.b16 %v447
      %v484 = vunpack.c.l.b16 %v448
      %v485 = vunpack.c.l.b16 %v449
      %v486 = vunpack.c.l.b16 %v450
      %v487 = vunpack.c.l.b16 %v451
      %v488 = vunpack.c.l.b16 %v452
      %v489 = vunpack.c.l.b16 %v453
      %v490 = vunpack.c.l.b16 %v454
      %v491 = vunpack.c.l.b16 %v455
      %v492 = vunpack.c.l.b16 %v456
      %v493 = vunpack.c.l.b16 %v457
      %v494 = vpack.c.b16 %v479, %v478
      %v495 = vpack.c.b16 %v481, %v480
      %v496 = vpack.c.b16 %v483, %v482
      %v497 = vpack.c.b16 %v485, %v484
      %v498 = vpack.c.b16 %v487, %v486
      %v499 = vpack.c.b16 %v489, %v488
      %v500 = vpack.c.b16 %v491, %v490
      %v501 = vpack.c.b16 %v493, %v492
      %510 = vmatpush.bf16.msra.mxu0 %v501
      %511 = vmatpush.bf16.msra.mxu0 %v500
      %512 = vmatpush.bf16.msra.mxu0 %v499
      %513 = vmatpush.bf16.msra.mxu0 %v498
      %514 = vmatpush.bf16.msra.mxu0 %v497
      %515 = vmatpush.bf16.msra.mxu0 %v496
      %516 = vmatpush.bf16.msra.mxu0 %v495
      %517 = vmatpush.bf16.msra.mxu0 %v494
      %518 = vmatmul.bf16.gmra.mxu0 %v434
      %v519 = vpop.f32.mrf.mxu0
      %v520 = vadd.f32 %v460, %v519
      %v521 = vpop.f32.mrf.mxu0
      %v522 = vadd.f32 %v460, %v521
      %523 = vmatmul.bf16.gmra.mxu0 %v435
      %v524 = vpop.f32.mrf.mxu0
      %v525 = vadd.f32 %v460, %v524
      %v526 = vpop.f32.mrf.mxu0
      %v527 = vadd.f32 %v460, %v526
      %528 = vmatmul.bf16.gmra.mxu0 %v436
      %v529 = vpop.f32.mrf.mxu0
      %v530 = vadd.f32 %v460, %v529
      %v531 = vpop.f32.mrf.mxu0
      %v532 = vadd.f32 %v460, %v531
      %533 = vmatmul.bf16.gmra.mxu0 %v437
      %v534 = vpop.f32.mrf.mxu0
      %v535 = vadd.f32 %v460, %v534
      %v536 = vpop.f32.mrf.mxu0
      %v537 = vadd.f32 %v460, %v536
      %538 = vmatmul.bf16.gmra.mxu0 %v438
      %v539 = vpop.f32.mrf.mxu0
      %v540 = vadd.f32 %v460, %v539
      %v541 = vpop.f32.mrf.mxu0
      %v542 = vadd.f32 %v460, %v541
      %543 = vmatmul.bf16.gmra.mxu0 %v439
      %v544 = vpop.f32.mrf.mxu0
      %v545 = vadd.f32 %v460, %v544
      %v546 = vpop.f32.mrf.mxu0
      %v547 = vadd.f32 %v460, %v546
      %548 = vmatmul.bf16.gmra.mxu0 %v440
      %v549 = vpop.f32.mrf.mxu0
      %v550 = vadd.f32 %v460, %v549
      %v551 = vpop.f32.mrf.mxu0
      %v552 = vadd.f32 %v460, %v551
      %553 = vmatmul.bf16.gmra.mxu0 %v441
      %v554 = vpop.f32.mrf.mxu0
      %v555 = vadd.f32 %v460, %v554
      %v556 = vpop.f32.mrf.mxu0
      %v557 = vadd.f32 %v460, %v556
      %558 = vdwg.mxu0
      %v559 = vmax.f32 %v520, 0.0
      %v560 = vmax.f32 %v522, 0.0
      %v561 = vmax.f32 %v525, 0.0
      %v562 = vmax.f32 %v527, 0.0
      %v563 = vmax.f32 %v530, 0.0
      %v564 = vmax.f32 %v532, 0.0
      %v565 = vmax.f32 %v535, 0.0
      %v566 = vmax.f32 %v537, 0.0
      %v567 = vmax.f32 %v540, 0.0
      %v568 = vmax.f32 %v542, 0.0
      %v569 = vmax.f32 %v545, 0.0
      %v570 = vmax.f32 %v547, 0.0
      %v571 = vmax.f32 %v550, 0.0
      %v572 = vmax.f32 %v552, 0.0
      %v573 = vmax.f32 %v555, 0.0
      %v574 = vmax.f32 %v557, 0.0
      %v575 = vpack.c.bf16 %v560, %v559
      %v576 = vpack.c.bf16 %v562, %v561
      %v577 = vpack.c.bf16 %v564, %v563
      %v578 = vpack.c.bf16 %v566, %v565
      %v579 = vpack.c.bf16 %v568, %v567
      %v580 = vpack.c.bf16 %v570, %v569
      %v581 = vpack.c.bf16 %v572, %v571
      %v582 = vpack.c.bf16 %v574, %v573
      %v583 = vld [vmem:[%s5] sm:$0xf]
      %v584 = vld [vmem:[%s5 + $0x4] sm:$0xf]
      %v585 = vld [vmem:[%s5 + $0x8] sm:$0xf]
      %v586 = vld [vmem:[%s5 + $0xc] sm:$0xf]
      %v587 = vld [vmem:[%s5 + $0x10] sm:$0xf]
      %v588 = vld [vmem:[%s5 + $0x14] sm:$0xf]
      %v589 = vld [vmem:[%s5 + $0x18] sm:$0xf]
      %v590 = vld [vmem:[%s5 + $0x1c] sm:$0xf]
      %v591 = vld [vmem:[%s5 + $0x20] sm:$0xf]
      %v592 = vld [vmem:[%s5 + $0x24] sm:$0xf]
      %v593 = vld [vmem:[%s5 + $0x28] sm:$0xf]
      %v594 = vld [vmem:[%s5 + $0x2c] sm:$0xf]
      %v595 = vld [vmem:[%s5 + $0x30] sm:$0xf]
      %v596 = vld [vmem:[%s5 + $0x34] sm:$0xf]
      %v597 = vld [vmem:[%s5 + $0x38] sm:$0xf]
      %v598 = vld [vmem:[%s5 + $0x3c] sm:$0xf]
      %v599 = vld [vmem:[%s6] sm:$0x1]
      %v601 = vperm.slane %v599, 0
      %v619 = vunpack.c.l.b16 %v583
      %v620 = vunpack.c.l.b16 %v584
      %v621 = vunpack.c.l.b16 %v585
      %v622 = vunpack.c.l.b16 %v586
      %v623 = vunpack.c.l.b16 %v587
      %v624 = vunpack.c.l.b16 %v588
      %v625 = vunpack.c.l.b16 %v589
      %v626 = vunpack.c.l.b16 %v590
      %v627 = vunpack.c.l.b16 %v591
      %v628 = vunpack.c.l.b16 %v592
      %v629 = vunpack.c.l.b16 %v593
      %v630 = vunpack.c.l.b16 %v594
      %v631 = vunpack.c.l.b16 %v595
      %v632 = vunpack.c.l.b16 %v596
      %v633 = vunpack.c.l.b16 %v597
      %v634 = vunpack.c.l.b16 %v598
      %v635 = vpack.c.b16 %v620, %v619
      %v636 = vpack.c.b16 %v622, %v621
      %v637 = vpack.c.b16 %v624, %v623
      %v638 = vpack.c.b16 %v626, %v625
      %v639 = vpack.c.b16 %v628, %v627
      %v640 = vpack.c.b16 %v630, %v629
      %v641 = vpack.c.b16 %v632, %v631
      %v642 = vpack.c.b16 %v634, %v633
      %651 = vmatpush.bf16.msra.mxu0 %v642
      %652 = vmatpush.bf16.msra.mxu0 %v641
      %653 = vmatpush.bf16.msra.mxu0 %v640
      %654 = vmatpush.bf16.msra.mxu0 %v639
      %655 = vmatpush.bf16.msra.mxu0 %v638
      %656 = vmatpush.bf16.msra.mxu0 %v637
      %657 = vmatpush.bf16.msra.mxu0 %v636
      %658 = vmatpush.bf16.msra.mxu0 %v635
      %659 = vmatmul.bf16.gmra.mxu0 %v575
      %v660 = vpop.f32.mrf.mxu0
      %v661 = vadd.f32 %v601, %v660
      %v662 = vpop.f32.mrf.mxu0
      %v663 = vadd.f32 %v601, %v662
      %664 = vmatmul.bf16.gmra.mxu0 %v576
      %v665 = vpop.f32.mrf.mxu0
      %v666 = vadd.f32 %v601, %v665
      %v667 = vpop.f32.mrf.mxu0
      %v668 = vadd.f32 %v601, %v667
      %669 = vmatmul.bf16.gmra.mxu0 %v577
      %v670 = vpop.f32.mrf.mxu0
      %v671 = vadd.f32 %v601, %v670
      %v672 = vpop.f32.mrf.mxu0
      %v673 = vadd.f32 %v601, %v672
      %674 = vmatmul.bf16.gmra.mxu0 %v578
      %v675 = vpop.f32.mrf.mxu0
      %v676 = vadd.f32 %v601, %v675
      %v677 = vpop.f32.mrf.mxu0
      %v678 = vadd.f32 %v601, %v677
      %679 = vmatmul.bf16.gmra.mxu0 %v579
      %v680 = vpop.f32.mrf.mxu0
      %v681 = vadd.f32 %v601, %v680
      %v682 = vpop.f32.mrf.mxu0
      %v683 = vadd.f32 %v601, %v682
      %684 = vmatmul.bf16.gmra.mxu0 %v580
      %v685 = vpop.f32.mrf.mxu0
      %v686 = vadd.f32 %v601, %v685
      %v687 = vpop.f32.mrf.mxu0
      %v688 = vadd.f32 %v601, %v687
      %689 = vmatmul.bf16.gmra.mxu0 %v581
      %v690 = vpop.f32.mrf.mxu0
      %v691 = vadd.f32 %v601, %v690
      %v692 = vpop.f32.mrf.mxu0
      %v693 = vadd.f32 %v601, %v692
      %694 = vmatmul.bf16.gmra.mxu0 %v582
      %v695 = vpop.f32.mrf.mxu0
      %v696 = vadd.f32 %v601, %v695
      %v697 = vpop.f32.mrf.mxu0
      %v698 = vadd.f32 %v601, %v697
      %699 = vdwg.mxu0
      %vm700 = vcmask 31744
      %701 = vst.msk [vmem:[%s280] sm:$0xff] %vm700, %v661
      %702 = vst.msk [vmem:[%s280 + $0x8] sm:$0xff] %vm700, %v663
      %703 = vst.msk [vmem:[%s280 + $0x10] sm:$0xff] %vm700, %v666
      %704 = vst.msk [vmem:[%s280 + $0x18] sm:$0xff] %vm700, %v668
      %705 = vst.msk [vmem:[%s280 + $0x20] sm:$0xff] %vm700, %v671
      %706 = vst.msk [vmem:[%s280 + $0x28] sm:$0xff] %vm700, %v673
      %707 = vst.msk [vmem:[%s280 + $0x30] sm:$0xff] %vm700, %v676
      %708 = vst.msk [vmem:[%s280 + $0x38] sm:$0xff] %vm700, %v678
      %709 = vst.msk [vmem:[%s280 + $0x40] sm:$0xff] %vm700, %v681
      %710 = vst.msk [vmem:[%s280 + $0x48] sm:$0xff] %vm700, %v683
      %711 = vst.msk [vmem:[%s280 + $0x50] sm:$0xff] %vm700, %v686
      %712 = vst.msk [vmem:[%s280 + $0x58] sm:$0xff] %vm700, %v688
      %713 = vst.msk [vmem:[%s280 + $0x60] sm:$0xff] %vm700, %v691
      %714 = vst.msk [vmem:[%s280 + $0x68] sm:$0xff] %vm700, %v693
      %715 = vst.msk [vmem:[%s280 + $0x70] sm:$0xff] %vm700, %v696
      %716 = vst.msk [vmem:[%s280 + $0x78] sm:$0xff] %vm700, %v698
      %s717 = smul.u32 16, %s18
      %p718 = scmp.lt.s32.totalorder %s717, 31
      %s719 = scalar_select %p718, %s717, 31
      %s720 = smul.addr %s719, 8
      %s721 = scalar_lea.vmem %s7, %s720
      // Predicated region
      $region49: #{tpu_custom_call.1} parent=47 // pred_check
        %p722 = pneg %p188
      $region50: #{tpu_custom_call.1} parent=47 // pred_check_branch
        %724 = sbr.rel (%p722) target = $region52
      $region51: #{tpu_custom_call.1} parent=47 // pred_region
        %s725 = smul.u32 16, %s18
      $region52: #{tpu_custom_call.1} parent=47 // pred_fallthru
        _
    $region48: #{tpu_custom_call.1} parent=5 // pred_fallthru
      _
    %p726 = scmp.le.s32.totalorder 2, %s13
    // Predicated region
    $region53: #{tpu_custom_call.1} parent=5 // pred_check
      %p727 = pneg %p726
    $region54: #{tpu_custom_call.1} parent=5 // pred_check_branch
      %729 = sbr.rel (%p727) target = $region56
    $region55: #{tpu_custom_call.1} parent=5 // pred_region
      %s730 = ssub.s32 %s13, 2
      // Predicated region
      $region57: #{tpu_custom_call.1} parent=55 // pred_check
        %p731 = pneg %p194
      $region58: #{tpu_custom_call.1} parent=55 // pred_check_branch
        %733 = sbr.rel (%p731) target = $region60
      $region59: #{tpu_custom_call.1} parent=55 // pred_region
        %s734 = smul.u32 16, %s19
        %p735 = scmp.lt.s32.totalorder %s734, 31
        %s736 = scalar_select %p735, %s734, 31
        %s737 = smul.addr %s736, 8
        %s738 = scalar_lea.vmem %s7, %s737
      $region60: #{tpu_custom_call.1} parent=55 // pred_fallthru
        _
    $region56: #{tpu_custom_call.1} parent=5 // pred_fallthru
      _
  $region6: #{tpu_custom_call.1} parent=0 // loop_footer
    %s17 = sadd.s32 1, %s13
  $region7: #{tpu_custom_call.1} parent=0 // loop_footer_branch
    %12 = sbr.rel target = $region3
  $region8: #{tpu_custom_call.1} parent=0 // loop_exit
    _

</llo_original>
